<compile_context>
chip_gen: v7x
topology: tpu7x:2x2x1
jax: 0.10.0
libtpu: 0.0.40
codegen_flags: <defaults>
</compile_context>

<pallas_src>
import jax
import jax.numpy as jnp
from jax.experimental import pallas as pl
from jax.experimental.pallas import tpu as pltpu


_LANES = 1024        # wide lane-dense last dim -> unmasked wide stores, big DMAs
_TILE_ROWS = 512     # (512, 1024) f32 block = 2 MiB/buffer (sweet spot for HBM roofline)


def _sigmoid_inverse_kernel(x_ref, o_ref):
    # clamp to [0.001, 0.999], then logit(x) = log(x / (1 - x))
    # (one EUP log + one reciprocal/mul instead of two logs).
    x = x_ref[...].astype(jnp.float32)
    x = jnp.clip(x, 0.001, 0.999)
    o_ref[...] = jnp.log(x / (1.0 - x)).astype(o_ref.dtype)


def _run_2d(x2d):
    rows, lanes = x2d.shape
    # Full-rows block when the slab is small (legal: equals the array dim);
    # otherwise a fixed 512-row block with a cdiv grid (ragged last block is
    # masked by the pipeline) -- no divisor-degradation to tiny tiles.
    tr = min(_TILE_ROWS, rows)
    grid = (pl.cdiv(rows, tr),)
    return pl.pallas_call(
        _sigmoid_inverse_kernel,
        out_shape=jax.ShapeDtypeStruct((rows, lanes), x2d.dtype),
        grid_spec=pltpu.PrefetchScalarGridSpec(
            num_scalar_prefetch=0,
            grid=grid,
            in_specs=[pl.BlockSpec((tr, lanes), lambda i: (i, 0))],
            out_specs=pl.BlockSpec((tr, lanes), lambda i: (i, 0)),
        ),
        compiler_params=pltpu.CompilerParams(
            dimension_semantics=("parallel",),
        ),
    )(x2d)


def _logit_jax(x):
    x = jnp.clip(x.astype(jnp.float32), 0.001, 0.999)
    return jnp.log(x / (1.0 - x))


@jax.jit
def sigmoid_inverse(x):
    """Inverse sigmoid (clamp to [0.001, 0.999] then logit), elementwise, any shape."""
    orig_shape = x.shape
    dtype = x.dtype
    n = x.size

    if n % _LANES == 0:
        # Fast path: no pad, no slice, no dtype pass -- reshapes are free.
        x2d = x.reshape(n // _LANES, _LANES)
        return _run_2d(x2d).reshape(orig_shape)

    # Ragged path: kernel on the lane-aligned prefix, tail (< _LANES elems) in JAX.
    x_flat = x.reshape(-1)
    n_main = (n // _LANES) * _LANES
    if n_main == 0:
        return _logit_jax(x_flat).astype(dtype).reshape(orig_shape)
    main = _run_2d(x_flat[:n_main].reshape(n_main // _LANES, _LANES)).reshape(-1)
    tail = _logit_jax(x_flat[n_main:]).astype(dtype)
    return jnp.concatenate([main, tail]).reshape(orig_shape)


if __name__ == "__main__":
    key = jax.random.PRNGKey(0)
    # Small NCHW input; values in [0, 1) (sigmoid-like), so the clamp only
    # touches the extremes.
    x = jax.random.uniform(key, (2, 4, 16, 16), dtype=jnp.float32)

    out = jax.block_until_ready(sigmoid_inverse(x))

    xc = jnp.clip(x, 0.001, 0.999)
    ref = jnp.log(xc / (1.0 - xc))
    assert out.shape == x.shape and out.dtype == x.dtype
    assert jnp.allclose(out, ref, atol=1e-5, rtol=1e-5)

    # Also exercise the ragged (non-multiple-of-1024) fallback path.
    x2 = jax.random.uniform(jax.random.PRNGKey(1), (4, 4, 16, 17), dtype=jnp.float32)
    out2 = jax.block_until_ready(sigmoid_inverse(x2))
    xc2 = jnp.clip(x2, 0.001, 0.999)
    assert jnp.allclose(out2, jnp.log(xc2 / (1.0 - xc2)), atol=1e-5, rtol=1e-5)

    print("KERNEL_OK")
</pallas_src>

<mosaic_0001>
module attributes {stable_mosaic.version = 11 : i64} {
  func.func @_sigmoid_inverse_kernel(%arg0: i32, %arg1: memref<2x1024xf32, #tpu.memory_space<vmem>>, %arg2: memref<2x1024xf32, #tpu.memory_space<vmem>>) attributes {dimension_semantics = [#tpu.dimension_semantics<parallel>], iteration_bounds = array<i64: 1>, scalar_prefetch = 0 : i64, scratch_operands = 0 : i64, tpu.core_type = #tpu.core_type<tc>, window_params = [{transform_indices = @transform_0, window_bounds = array<i64: 2, 1024>}, {transform_indices = @transform_1, window_bounds = array<i64: 2, 1024>}]} {
    %c0 = arith.constant 0 : index
    %c0_0 = arith.constant 0 : index
    %0 = vector.load %arg1[%c0, %c0_0] : memref<2x1024xf32, #tpu.memory_space<vmem>>, vector<2x1024xf32>
    %cst = arith.constant 1.000000e-03 : f32
    %cst_1 = arith.constant 9.990000e-01 : f32
    %1 = vector.broadcast %cst : f32 to vector<2x1024xf32>
    %2 = arith.maximumf %1, %0 : vector<2x1024xf32>
    %3 = vector.broadcast %cst_1 : f32 to vector<2x1024xf32>
    %4 = arith.minimumf %3, %2 : vector<2x1024xf32>
    %cst_2 = arith.constant 1.000000e+00 : f32
    %5 = vector.broadcast %cst_2 : f32 to vector<2x1024xf32>
    %6 = arith.subf %5, %4 : vector<2x1024xf32>
    %7 = arith.divf %4, %6 : vector<2x1024xf32>
    %8 = math.log %7 : vector<2x1024xf32>
    %c0_3 = arith.constant 0 : index
    %c0_4 = arith.constant 0 : index
    %9 = vector.load %arg2[%c0_3, %c0_4] : memref<2x1024xf32, #tpu.memory_space<vmem>>, vector<2x1024xf32>
    tpu.vector_store %arg2[%c0_3, %c0_4], %8 {strides = array<i32>} : memref<2x1024xf32, #tpu.memory_space<vmem>>, vector<2x1024xf32>,
    return
  }
  func.func @transform_0(%arg0: i32) -> (i32, i32) {
    %c0_i32 = arith.constant 0 : i32
    %c0_i32_0 = arith.constant 0 : i32
    return %arg0, %c0_i32 : i32, i32
  }
  func.func @transform_1(%arg0: i32) -> (i32, i32) {
    %c0_i32 = arith.constant 0 : i32
    %c0_i32_0 = arith.constant 0 : i32
    return %arg0, %c0_i32 : i32, i32
  }
}

</mosaic_0001>

<llo_original>
// kernel: sigmoid_inverse.1
$region0: #{sigmoid_inverse.1}
  #allocation0 [shape = 'u32[]', space=smem, size = 0x4, offset = 0x4, fixed_abs, tag = 'smem constant byte address 0x4 - core index']
  #allocation1 [shape = 'u32[144,128]{1,0:T(1,128)}', space=vmem, size = 0x12000, scoped, tag = 'internal scratch']
  %s0 = inlined_call_operand.vmem [shape: f32[2,1024], index: 0, kind: input, shape index: {}]
  %s1 = inlined_call_operand.vmem [shape: f32[2,1024], index: 1, kind: output, shape index: {}]
  %s2 = sld [smem:[#allocation0]]
  $region14: #{sigmoid_inverse.1} parent=0
    _
  %s4 = ssub.s32 1, %s2
  %s5 = scalar_select 0, %s4, %s2
  // Predicated region
  $region2: #{sigmoid_inverse.1} parent=0 // pred_check
    _
  $region3: #{sigmoid_inverse.1} parent=0 // pred_check_branch
    %7 = sbr.rel (0) target = $region5
  $region4: #{sigmoid_inverse.1} parent=0 // pred_region
    _
  $region5: #{sigmoid_inverse.1} parent=0 // pred_fallthru
    _
  %v8 = vld [vmem:[%s0] sm:$0xff]
  %v9 = vld [vmem:[%s0 + $0x8] sm:$0xff]
  %v10 = vmax.f32 %v8, 0.001
  %v11 = vmax.f32 %v9, 0.001
  %v12 = vmin.f32 %v10, 0.999
  %v13 = vmin.f32 %v11, 0.999
  %v14 = vsub.f32 1.0, %v12
  %v15 = vsub.f32 1.0, %v13
  %v16 = vrcp.pop %v14
  %v17 = vmul.f32 %v12, %v16
  %v18 = vrcp.pop %v15
  %v19 = vmul.f32 %v13, %v18
  %v20 = vlog2.pop %v17
  %v21 = vmul.f32 %v20, 0.6931472
  %v22 = vlog2.pop %v19
  %v23 = vmul.f32 %v22, 0.6931472
  %24 = vst [vmem:[%s1] sm:$0xff] %v21
  %25 = vst [vmem:[%s1 + $0x8] sm:$0xff] %v23
  // Predicated region
  $region6: #{sigmoid_inverse.1} parent=0 // pred_check
    _
  $region7: #{sigmoid_inverse.1} parent=0 // pred_check_branch
    %27 = sbr.rel (0) target = $region9
  $region8: #{sigmoid_inverse.1} parent=0 // pred_region
    _
  $region9: #{sigmoid_inverse.1} parent=0 // pred_fallthru
    _
  // Predicated region
  $region10: #{sigmoid_inverse.1} parent=0 // pred_check
    _
  $region11: #{sigmoid_inverse.1} parent=0 // pred_check_branch
    %29 = sbr.rel (0) target = $region13
  $region12: #{sigmoid_inverse.1} parent=0 // pred_region
    _
  $region13: #{sigmoid_inverse.1} parent=0 // pred_fallthru
    _

</llo_original>
